<compile_context>
chip_gen: v7x
topology: tpu7x:2x2x1
jax: 0.10.0
libtpu: 0.0.40
codegen_flags: <defaults>
</compile_context>

<pallas_src>
import math
import functools

import jax
import jax.numpy as jnp
from jax.experimental import pallas as pl
from jax.experimental.pallas import tpu as pltpu

LN_EPS = 1e-5  # PyTorch nn.LayerNorm default


def _layer_norm(x, gamma, beta):
    mean = jnp.mean(x, axis=-1, keepdims=True)
    var = jnp.mean((x - mean) ** 2, axis=-1, keepdims=True)
    return (x - mean) * jax.lax.rsqrt(var + LN_EPS) * gamma + beta


# --------------------------------------------------------------------------------------
# Text path kernel: q = layer_norm1(text) @ Wq^T + bq   (computed ONCE, outside the grid)
# --------------------------------------------------------------------------------------
def _text_q_kernel(text_ref, wq_ref, vec_ref, q_ref):
    # vec_ref rows: 0 = bq, 1 = g1, 2 = b1
    t = text_ref[...].astype(jnp.float32)
    t_ln = _layer_norm(t, vec_ref[1:2, :], vec_ref[2:3, :])
    q_ref[...] = jnp.dot(t_ln, wq_ref[...],
                         preferred_element_type=jnp.float32) + vec_ref[0:1, :]


# --------------------------------------------------------------------------------------
# Main kernel: one grid step processes a block of Vb videos against the precomputed Q.
# --------------------------------------------------------------------------------------
def transformer_kernel(q_ref, video_ref, wk_ref, wv_ref, wo_ref, wl_ref, vec_ref,
                       out_ref, attn_scratch,
                       *, num_heads, head_dim, vb, num_frames, num_texts):
    # vec_ref rows: 0=bk 1=bv 2=bo 3=bl 4=g1 5=b1 6=g2 7=b2 8=g3 9=b3
    F, T, Dh = num_frames, num_texts, head_dim
    E = num_heads * head_dim
    f32 = jnp.float32
    mm_dtype = wk_ref.dtype  # bf16 in production on v5e/v6e/v7x; f32 in the demo

    vflat = video_ref[...].reshape(vb * F, E).astype(f32)
    v_ln = _layer_norm(vflat, vec_ref[4:5, :], vec_ref[5:6, :]).astype(mm_dtype)

    # Full-width K/V projections: one lane-dense N=E matmul each (MXU stays full),
    # bias added once — per-head work below only slices these activations.
    k_all = (jnp.dot(v_ln, wk_ref[...], preferred_element_type=f32)
             + vec_ref[0:1, :]).astype(mm_dtype)                        # (vb*F, E)
    v_all = (jnp.dot(v_ln, wv_ref[...], preferred_element_type=f32)
             + vec_ref[1:2, :]).astype(mm_dtype)                        # (vb*F, E)

    scale = 1.0 / math.sqrt(Dh)

    # Head loop body is now lean (one QK dot, softmax, one batched PV dot, one store).
    # TODO(synk): for large num_heads move heads to a fori_loop / grid axis with
    # pl.ds + pl.multiple_of offsets once Dh is 128-aligned.
    for h in range(num_heads):
        c0, c1 = h * Dh, (h + 1) * Dh
        q_h = q_ref[h]                                   # (T, Dh) — free leading-axis index
        k_h = k_all[:, c0:c1]                            # (vb*F, Dh)
        v_h = v_all[:, c0:c1].reshape(vb, F, Dh)         # (vb, F, Dh)

        # Batched logits across all vb videos: contract last dims — no transposes.
        logits = jax.lax.dot_general(
            q_h, k_h, (((1,), (1,)), ((), ())),
            preferred_element_type=f32) * scale                          # (T, vb*F)
        logits = logits.reshape(T, vb, F)
        # Softmax over frames (== dim=2 of the PyTorch (V,H,F,T) layout). Exact
        # normalization (not approx reciprocal) for parity with the reference.
        m = jnp.max(logits, axis=-1, keepdims=True)
        e = jnp.exp(logits - m)
        w = e / jnp.sum(e, axis=-1, keepdims=True)                       # (T, vb, F)

        # Batched PV, leading batch dims: (vb, T, F) x (vb, F, Dh) -> (vb, T, Dh)
        w_vtf = jnp.swapaxes(w, 0, 1).astype(mm_dtype)
        attn_h = jax.lax.dot_general(
            w_vtf, v_h, (((2,), (1,)), ((0,), (0,))),
            preferred_element_type=f32)
        attn_scratch[:, :, c0:c1] = attn_h.astype(attn_scratch.dtype)

    attn = attn_scratch[...].reshape(vb * T, E)            # already in compute_dtype
    o = jnp.dot(attn, wo_ref[...], preferred_element_type=f32) + vec_ref[2:3, :]
    a2 = _layer_norm(o, vec_ref[6:7, :], vec_ref[7:8, :])
    lin = jnp.dot(a2.astype(mm_dtype), wl_ref[...],
                  preferred_element_type=f32) + vec_ref[3:4, :]
    # TODO(synk): dropout treated as identity (inference mode); no RNG dropout in-kernel.
    out = _layer_norm(a2 + lin, vec_ref[8:9, :], vec_ref[9:10, :])
    out_ref[...] = out.reshape(vb, T, E).astype(out_ref.dtype)


# --------------------------------------------------------------------------------------
# Wrapper helpers
# --------------------------------------------------------------------------------------
def _pick_vb(num_vids, num_frames, target_rows=512):
    """Largest divisor of num_vids with vb*F <= target_rows, keeping >= 2 grid steps
    when possible (v7x has 2 TensorCores per chip)."""
    cap = max(1, target_rows // max(num_frames, 1))
    divisors = [d for d in range(1, num_vids + 1) if num_vids % d == 0 and d <= cap]
    if not divisors:
        return 1
    pref = [d for d in divisors if num_vids // d >= 2]
    return max(pref) if pref else max(divisors)


def _pick_vmem_limit():
    """Generation-dependent scoped-VMEM limit: ~96 MiB on v5e/v6e (128 MiB physical),
    ~48 MiB on v7x (64 MiB physical). Conservative fallback if query unavailable."""
    try:
        phys = int(pltpu.get_tpu_info().vmem_capacity_bytes)
        return min(phys * 3 // 4, 100 * 1024 * 1024)
    except Exception:
        return 48 * 1024 * 1024


def _const_spec(shape):
    """Grid-invariant block: constant index_map, single-buffered (halves VMEM cost)."""
    index_map = lambda i, _n=len(shape): (0,) * _n
    try:
        return pl.BlockSpec(shape, index_map, pipeline_mode=pl.Buffered(1))
    except Exception:
        return pl.BlockSpec(shape, index_map)


# --------------------------------------------------------------------------------------
# Wrapper
# --------------------------------------------------------------------------------------
def transformer_forward(text, video, params, num_heads, *, vb=None,
                        compute_dtype=jnp.float32):
    T, E = text.shape
    V, F, _ = video.shape
    assert E % num_heads == 0, (E, num_heads)
    Dh = E // num_heads
    f32 = jnp.float32

    # ---- text path (video-independent): LN1 + Q projection, done once ----
    text_vecs = jnp.stack([params["bq"], params["g1"], params["b1"]]).astype(f32)   # (3, E)
    q2d = pl.pallas_call(
        _text_q_kernel,
        out_shape=jax.ShapeDtypeStruct((T, E), f32),
        grid_spec=pltpu.PrefetchScalarGridSpec(
            num_scalar_prefetch=0,
            grid=(1,),
            in_specs=[pl.BlockSpec((T, E), lambda i: (0, 0)),
                      pl.BlockSpec((E, E), lambda i: (0, 0)),
                      pl.BlockSpec((3, E), lambda i: (0, 0))],
            out_specs=pl.BlockSpec((T, E), lambda i: (0, 0)),
        ),
    )(text.astype(f32), params["wq"].T.astype(f32), text_vecs)
    # One-time head split (outside the per-video grid), already in the MXU compute dtype.
    q_heads = q2d.reshape(T, num_heads, Dh).transpose(1, 0, 2).astype(compute_dtype)

    # ---- pick the video block size ----
    if vb is None:
        vb = _pick_vb(V, F)
    assert V % vb == 0, (V, vb)

    # ---- packed per-row vectors: bk bv bo bl g1 b1 g2 b2 g3 b3 ----
    vecs = jnp.stack([params["bk"], params["bv"], params["bo"], params["bl"],
                      params["g1"], params["b1"], params["g2"], params["b2"],
                      params["g3"], params["b3"]]).astype(f32)                       # (10, E)

    # Pre-transposed weights so the kernel does plain x @ W_t (= x @ W.T)
    wk_t = params["wk"].T.astype(compute_dtype)
    wv_t = params["wv"].T.astype(compute_dtype)
    wo_t = params["wo"].T.astype(compute_dtype)
    wl_t = params["wl"].T.astype(compute_dtype)

    kernel = functools.partial(transformer_kernel, num_heads=num_heads, head_dim=Dh,
                               vb=vb, num_frames=F, num_texts=T)

    return pl.pallas_call(
        kernel,
        out_shape=jax.ShapeDtypeStruct((V, T, E), jnp.float32),
        grid_spec=pltpu.PrefetchScalarGridSpec(
            num_scalar_prefetch=0,
            grid=(V // vb,),
            in_specs=[
                _const_spec((num_heads, T, Dh)),                 # q (constant across grid)
                pl.BlockSpec((vb, F, E), lambda i: (i, 0, 0)),   # Vb videos per grid step
                _const_spec((E, E)), _const_spec((E, E)),        # wk, wv
                _const_spec((E, E)), _const_spec((E, E)),        # wo, wl
                _const_spec((10, E)),                            # packed biases + LN params
            ],
            out_specs=pl.BlockSpec((vb, T, E), lambda i: (i, 0, 0)),
            scratch_shapes=[pltpu.VMEM((vb, T, E), compute_dtype)],
        ),
        compiler_params=pltpu.CompilerParams(
            dimension_semantics=("parallel",),
            vmem_limit_bytes=_pick_vmem_limit(),
        ),
    )(q_heads, video, wk_t, wv_t, wo_t, wl_t, vecs)


# --------------------------------------------------------------------------------------
# Pure-JAX reference mirroring the PyTorch forward (dropout = identity)
# --------------------------------------------------------------------------------------
def transformer_reference(text, video, params, num_heads):
    T, E = text.shape
    V, F, _ = video.shape
    Dh = E // num_heads

    def ln(x, g, b):
        mean = jnp.mean(x, axis=-1, keepdims=True)
        var = jnp.mean((x - mean) ** 2, axis=-1, keepdims=True)
        return (x - mean) / jnp.sqrt(var + LN_EPS) * g + b

    t = ln(text, params["g1"], params["b1"])
    vv = ln(video, params["g1"], params["b1"])

    q = t @ params["wq"].T + params["bq"]                      # (T, E)
    q = q.reshape(T, num_heads, Dh).transpose(1, 2, 0)         # (H, Dh, T)
    k = vv @ params["wk"].T + params["bk"]                     # (V, F, E)
    k = k.reshape(V, F, num_heads, Dh).transpose(0, 2, 1, 3)   # (V, H, F, Dh)
    v = vv @ params["wv"].T + params["bv"]
    v = v.reshape(V, F, num_heads, Dh).transpose(0, 2, 3, 1)   # (V, H, Dh, F)

    logits = jnp.einsum("vhfd,hdt->vhft", k, q) / math.sqrt(Dh)
    w = jax.nn.softmax(logits, axis=2)                         # softmax over frames
    attn = jnp.einsum("vhdf,vhft->vhdt", v, w)                 # (V, H, Dh, T)
    attn = attn.transpose(0, 3, 1, 2).reshape(V, T, E)
    o = attn @ params["wo"].T + params["bo"]

    a2 = ln(o, params["g2"], params["b2"])
    lin = a2 @ params["wl"].T + params["bl"]
    return ln(a2 + lin, params["g3"], params["b3"])


if __name__ == "__main__":
    # Small config: embed_dim=32, 4 heads, 8 texts, 2 videos x 8 frames
    E, H = 32, 4
    T, V, F = 8, 2, 8

    key = jax.random.PRNGKey(0)
    k_text, k_video = jax.random.split(key)
    text = jax.random.normal(k_text, (T, E), dtype=jnp.float32)
    video = jax.random.normal(k_video, (V, F, E), dtype=jnp.float32)

    # Deterministic parameters, matching Transformer._init_parameters:
    # all linear/proj weights = identity, biases = 0; LayerNorm gamma=1, beta=0.
    eye = jnp.eye(E, dtype=jnp.float32)
    zeros = jnp.zeros((E,), dtype=jnp.float32)
    ones = jnp.ones((E,), dtype=jnp.float32)
    params = dict(
        wq=eye, bq=zeros, wk=eye, bk=zeros, wv=eye, bv=zeros,
        wo=eye, bo=zeros, wl=eye, bl=zeros,
        g1=ones, b1=zeros, g2=ones, b2=zeros, g3=ones, b3=zeros,
    )

    out = transformer_forward(text, video, params, num_heads=H)
    out = jax.block_until_ready(out)

    ref = transformer_reference(text, video, params, num_heads=H)
    assert out.shape == (V, T, E), out.shape
    # Softmax normalization is exact now; demo runs f32 end-to-end, so this is loose.
    assert jnp.allclose(out, ref, atol=2e-3, rtol=2e-3), float(jnp.max(jnp.abs(out - ref)))

    print("KERNEL_OK")
</pallas_src>

<mosaic_0001>
module attributes {stable_mosaic.version = 11 : i64} {
  func.func @_text_q_kernel(%arg0: i32, %arg1: memref<8x32xf32, #tpu.memory_space<vmem>>, %arg2: memref<32x32xf32, #tpu.memory_space<vmem>>, %arg3: memref<3x32xf32, #tpu.memory_space<vmem>>, %arg4: memref<8x32xf32, #tpu.memory_space<vmem>>) attributes {dimension_semantics = [#tpu.dimension_semantics<arbitrary>], iteration_bounds = array<i64: 1>, scalar_prefetch = 0 : i64, scratch_operands = 0 : i64, tpu.core_type = #tpu.core_type<tc>, window_params = [{pipeline_mode = #tpu.pipeline_mode<synchronous>, transform_indices = @transform_0, window_bounds = array<i64: 8, 32>}, {pipeline_mode = #tpu.pipeline_mode<synchronous>, transform_indices = @transform_1, window_bounds = array<i64: 32, 32>}, {pipeline_mode = #tpu.pipeline_mode<synchronous>, transform_indices = @transform_2, window_bounds = array<i64: 3, 32>}, {pipeline_mode = #tpu.pipeline_mode<synchronous>, transform_indices = @transform_3, window_bounds = array<i64: 8, 32>}]} {
    %c0 = arith.constant 0 : index
    %c0_0 = arith.constant 0 : index
    %0 = vector.load %arg1[%c0, %c0_0] : memref<8x32xf32, #tpu.memory_space<vmem>>, vector<8x32xf32>
    %c1 = arith.constant 1 : index
    %c0_1 = arith.constant 0 : index
    %1 = vector.load %arg3[%c1, %c0_1] : memref<3x32xf32, #tpu.memory_space<vmem>>, vector<1x32xf32>
    %c2 = arith.constant 2 : index
    %c0_2 = arith.constant 0 : index
    %2 = vector.load %arg3[%c2, %c0_2] : memref<3x32xf32, #tpu.memory_space<vmem>>, vector<1x32xf32>
    %cst = arith.constant dense<0.000000e+00> : vector<8xf32>
    %3 = vector.multi_reduction <add>, %0, %cst [1] : vector<8x32xf32> to vector<8xf32>
    %4 = vector.shape_cast %3 : vector<8xf32> to vector<8x1xf32>
    %cst_3 = arith.constant 3.200000e+01 : f32
    %5 = vector.broadcast %cst_3 : f32 to vector<8x1xf32>
    %6 = arith.divf %4, %5 : vector<8x1xf32>
    %7 = vector.broadcast %6 : vector<8x1xf32> to vector<8x32xf32>
    %8 = arith.subf %0, %7 : vector<8x32xf32>
    %9 = arith.mulf %8, %8 : vector<8x32xf32>
    %cst_4 = arith.constant dense<0.000000e+00> : vector<8xf32>
    %10 = vector.multi_reduction <add>, %9, %cst_4 [1] : vector<8x32xf32> to vector<8xf32>
    %11 = vector.shape_cast %10 : vector<8xf32> to vector<8x1xf32>
    %cst_5 = arith.constant 3.200000e+01 : f32
    %12 = vector.broadcast %cst_5 : f32 to vector<8x1xf32>
    %13 = arith.divf %11, %12 : vector<8x1xf32>
    %14 = vector.broadcast %6 : vector<8x1xf32> to vector<8x32xf32>
    %15 = arith.subf %0, %14 : vector<8x32xf32>
    %cst_6 = arith.constant 9.99999974E-6 : f32
    %16 = vector.broadcast %cst_6 : f32 to vector<8x1xf32>
    %17 = arith.addf %13, %16 : vector<8x1xf32>
    %18 = math.rsqrt %17 : vector<8x1xf32>
    %19 = vector.broadcast %18 : vector<8x1xf32> to vector<8x32xf32>
    %20 = arith.mulf %15, %19 : vector<8x32xf32>
    %21 = vector.broadcast %1 : vector<1x32xf32> to vector<8x32xf32>
    %22 = arith.mulf %20, %21 : vector<8x32xf32>
    %23 = vector.broadcast %2 : vector<1x32xf32> to vector<8x32xf32>
    %24 = arith.addf %22, %23 : vector<8x32xf32>
    %c0_7 = arith.constant 0 : index
    %c0_8 = arith.constant 0 : index
    %25 = vector.load %arg2[%c0_7, %c0_8] : memref<32x32xf32, #tpu.memory_space<vmem>>, vector<32x32xf32>
    %cst_9 = arith.constant dense<0.000000e+00> : vector<8x32xf32>
    %26 = tpu.matmul %24, %25, %cst_9 {dimension_numbers = #tpu.dot_dimension_numbers<[1], [0], [0], [1], [0, 0, 1, 1], [], []>} : vector<8x32xf32>, vector<32x32xf32>, vector<8x32xf32> -> vector<8x32xf32>
    %c0_10 = arith.constant 0 : index
    %c0_11 = arith.constant 0 : index
    %27 = vector.load %arg3[%c0_10, %c0_11] : memref<3x32xf32, #tpu.memory_space<vmem>>, vector<1x32xf32>
    %28 = vector.broadcast %27 : vector<1x32xf32> to vector<8x32xf32>
    %29 = arith.addf %26, %28 : vector<8x32xf32>
    %c0_12 = arith.constant 0 : index
    %c0_13 = arith.constant 0 : index
    %30 = vector.load %arg4[%c0_12, %c0_13] : memref<8x32xf32, #tpu.memory_space<vmem>>, vector<8x32xf32>
    tpu.vector_store %arg4[%c0_12, %c0_13], %29 {strides = array<i32>} : memref<8x32xf32, #tpu.memory_space<vmem>>, vector<8x32xf32>,
    return
  }
  func.func @transform_0(%arg0: i32) -> (i32, i32) {
    %c0_i32 = arith.constant 0 : i32
    %c0_i32_0 = arith.constant 0 : i32
    %c0_i32_1 = arith.constant 0 : i32
    return %c0_i32, %c0_i32_0 : i32, i32
  }
  func.func @transform_1(%arg0: i32) -> (i32, i32) {
    %c0_i32 = arith.constant 0 : i32
    %c0_i32_0 = arith.constant 0 : i32
    %c0_i32_1 = arith.constant 0 : i32
    return %c0_i32, %c0_i32_0 : i32, i32
  }
  func.func @transform_2(%arg0: i32) -> (i32, i32) {
    %c0_i32 = arith.constant 0 : i32
    %c0_i32_0 = arith.constant 0 : i32
    %c0_i32_1 = arith.constant 0 : i32
    return %c0_i32, %c0_i32_0 : i32, i32
  }
  func.func @transform_3(%arg0: i32) -> (i32, i32) {
    %c0_i32 = arith.constant 0 : i32
    %c0_i32_0 = arith.constant 0 : i32
    %c0_i32_1 = arith.constant 0 : i32
    return %c0_i32, %c0_i32_0 : i32, i32
  }
}

</mosaic_0001>

<llo_original>
// kernel: tpu_custom_call.1
$region0: #{tpu_custom_call.1}
  #allocation0 [shape = 'u32[]', space=smem, size = 0x4, offset = 0x4, fixed_abs, tag = 'smem constant byte address 0x4 - core index']
  #allocation1 [shape = 'u32[144,128]{1,0:T(1,128)}', space=vmem, size = 0x12000, scoped, tag = 'internal scratch']
  %s0 = inlined_call_operand.hbm [shape: f32[8,32], index: 0, kind: input, shape index: {}]
  %s1 = inlined_call_operand.hbm [shape: f32[32,32], index: 1, kind: input, shape index: {}]
  %s2 = inlined_call_operand.vmem [shape: f32[3,32], index: 2, kind: input, shape index: {}]
  %s3 = inlined_call_operand.hbm [shape: f32[8,32], index: 3, kind: output, shape index: {}]
  %s4 = sld [smem:[#allocation0]]
  $region30: #{tpu_custom_call.1} parent=0
    _
  %s6 = ssub.s32 1, %s4
  %s7 = scalar_select 0, %s6, %s4
  $region1: #{tpu_custom_call.1} parent=0
    #allocation2 [shape = 'u8[4096]{0}', space=vmem, size = 0x1000, scoped, tag = 'input window, operand 0, single buffered']
    #allocation3 [shape = 's32[1]{0}', space=sflag, size = 0x4, scoped, tag = 'scoped memory for tpu_custom_call.1']
    #allocation4 [shape = 's32[1]{0}', space=sflag, size = 0x4, scoped, tag = 'scoped memory for tpu_custom_call.1']
    #allocation5 [shape = 'u8[16384]{0}', space=vmem, size = 0x4000, scoped, tag = 'input window, operand 1, single buffered']
    #allocation6 [shape = 's32[1]{0}', space=sflag, size = 0x4, scoped, tag = 'scoped memory for tpu_custom_call.1']
    #allocation7 [shape = 'u8[4096]{0}', space=vmem, size = 0x1000, scoped, tag = 'output window, operand 0, single buffered']
    %8 = vsyncpa [#allocation3], 0
    %9 = vsyncpa [#allocation6], 0
    %10 = vsyncpa [#allocation4], 0
    // Predicated region
    $region2: #{tpu_custom_call.1} parent=1 // pred_check
      _
    $region3: #{tpu_custom_call.1} parent=1 // pred_check_branch
      %12 = sbr.rel (0) target = $region5
    $region4: #{tpu_custom_call.1} parent=1 // pred_region
      %s14 = ssub.s32 128, 128
      %15 = vsyncadd [#allocation3], %s14
      %s17 = sshll.u32 [#allocation2], 4
      %s18 = int_to_ptr.vmem [resolvable:$true] %s17
      %20 = dma.hbm_to_vmem [thread:$0]  %s0, 128, %s18, [#allocation3]
    $region5: #{tpu_custom_call.1} parent=1 // pred_fallthru
      _
    // Predicated region
    $region6: #{tpu_custom_call.1} parent=1 // pred_check
      _
    $region7: #{tpu_custom_call.1} parent=1 // pred_check_branch
      %22 = sbr.rel (0) target = $region9
    $region8: #{tpu_custom_call.1} parent=1 // pred_region
      %s24 = ssub.s32 512, 512
      %25 = vsyncadd [#allocation6], %s24
      %s26 = sshll.u32 [#allocation5], 4
      %s27 = int_to_ptr.vmem [resolvable:$true] %s26
      %32 = dma.hbm_to_vmem [thread:$0]  %s1, 512, %s27, [#allocation6], 128, 128, 8
    $region9: #{tpu_custom_call.1} parent=1 // pred_fallthru
      _
    // Predicated region
    $region10: #{tpu_custom_call.1} parent=1 // pred_check
      _
    $region11: #{tpu_custom_call.1} parent=1 // pred_check_branch
      %34 = sbr.rel (0) target = $region13
    $region12: #{tpu_custom_call.1} parent=1 // pred_region
      _
    $region13: #{tpu_custom_call.1} parent=1 // pred_fallthru
      _
    // Predicated region
    $region14: #{tpu_custom_call.1} parent=1 // pred_check
      _
    $region15: #{tpu_custom_call.1} parent=1 // pred_check_branch
      %36 = sbr.rel (0) target = $region17
    $region16: #{tpu_custom_call.1} parent=1 // pred_region
      %37 = dma.done [#allocation3], 128
    $region17: #{tpu_custom_call.1} parent=1 // pred_fallthru
      _
    // Predicated region
    $region18: #{tpu_custom_call.1} parent=1 // pred_check
      _
    $region19: #{tpu_custom_call.1} parent=1 // pred_check_branch
      %39 = sbr.rel (0) target = $region21
    $region20: #{tpu_custom_call.1} parent=1 // pred_region
      %40 = dma.done [#allocation6], 512
    $region21: #{tpu_custom_call.1} parent=1 // pred_fallthru
      _
    %v41 = vld [vmem:[#allocation2] sm:$0xff]
    %v42 = vld [vmem:[%s2 + $0x1] sm:$0x1]
    %v43 = vld [vmem:[%s2 + $0x2] sm:$0x1]
    %vm44 = vcmask 261120
    %v45 = vsel %vm44, %v41, 0.0
    %46 = vadd.xlane.f32.xlu0 %v45
    %v47 = vpop.xlane.xlu0 %46
    %v48 = vrcp.pop 32.0
    %v49 = vmul.f32 %v47, %v48
    %v50 = vsub.f32 %v41, %v49
    %v51 = vmul.f32 %v50, %v50
    %v52 = vsel %vm44, %v51, 0.0
    %53 = vadd.xlane.f32.xlu0 %v52
    %v54 = vpop.xlane.xlu0 %53
    %v55 = vmul.f32 %v54, %v48
    %v56 = vadd.f32 %v55, 1e-05
    %v57 = vrsqrt.pop %v56
    %v58 = vmul.f32 %v50, %v57
    %v59 = vlaneseq
    %v60 = vshrl.u32 %v59, 7
    %v61 = vsub.s32 0, %v60
    %v62 = vrot.slane %v42, %v61
    %v63 = vmul.f32 %v58, %v62
    %v64 = vlaneseq
    %v65 = vshrl.u32 %v64, 7
    %v66 = vsub.s32 0, %v65
    %v67 = vrot.slane %v43, %v66
    %v68 = vadd.f32 %v63, %v67
    %v69 = vld [vmem:[#allocation5] sm:$0xff]
    %v70 = vld [vmem:[#allocation5 + $0x8] sm:$0xff]
    %v71 = vld [vmem:[#allocation5 + $0x10] sm:$0xff]
    %v72 = vld [vmem:[#allocation5 + $0x18] sm:$0xff]
    %v73 = vld [vmem:[%s2] sm:$0x1]
    %v74 = vlaneseq
    %v75 = vshrl.u32 %v74, 7
    %v76 = vsub.s32 0, %v75
    %v77 = vrot.slane %v73, %v76
    %v79 = vsel %vm44, %v68, 0
    %81 = vmatprep.subr.mxu0 0.0
    %82 = vmatpush1.msra.mxu0 %v69
    %83 = vmatprep.subr.mxu0 0.0
    %84 = vmatpush1.msra.mxu0 %v70
    %85 = vmatprep.subr.mxu0 0.0
    %86 = vmatpush1.msra.mxu0 %v71
    %87 = vmatprep.subr.mxu0 0.0
    %88 = vmatpush1.msra.mxu0 %v72
    %89 = vmatprep.subr.mxu0 0.0
    %90 = vmatpush1.msra.mxu0 0.0
    %91 = vmatprep.subr.mxu0 0.0
    %92 = vmatpush1.msra.mxu0 0.0
    %93 = vmatprep.subr.mxu0 0.0
    %94 = vmatpush1.msra.mxu0 0.0
    %95 = vmatprep.subr.mxu0 0.0
    %96 = vmatpush1.msra.mxu0 0.0
    %97 = vmatprep.subr.mxu0 0.0
    %98 = vmatpush1.msra.mxu0 0.0
    %99 = vmatprep.subr.mxu0 0.0
    %100 = vmatpush1.msra.mxu0 0.0
    %101 = vmatprep.subr.mxu0 0.0
    %102 = vmatpush1.msra.mxu0 0.0
    %103 = vmatprep.subr.mxu0 0.0
    %104 = vmatpush1.msra.mxu0 0.0
    %105 = vmatprep.subr.mxu0 0.0
    %106 = vmatpush1.msra.mxu0 0.0
    %107 = vmatprep.subr.mxu0 0.0
    %108 = vmatpush1.msra.mxu0 0.0
    %109 = vmatprep.subr.mxu0 0.0
    %110 = vmatpush1.msra.mxu0 0.0
    %111 = vmatprep.subr.mxu0 0.0
    %112 = vmatpush1.msra.mxu0 0.0
    %113 = vmatprep.subr.mxu0 0.0
    %114 = vmatpush1.msra.mxu0 0.0
    %115 = vmatprep.subr.mxu0 0.0
    %116 = vmatpush1.msra.mxu0 0.0
    %117 = vmatprep.subr.mxu0 0.0
    %118 = vmatpush1.msra.mxu0 0.0
    %119 = vmatprep.subr.mxu0 0.0
    %120 = vmatpush1.msra.mxu0 0.0
    %121 = vmatprep.subr.mxu0 0.0
    %122 = vmatpush1.msra.mxu0 0.0
    %123 = vmatprep.subr.mxu0 0.0
    %124 = vmatpush1.msra.mxu0 0.0
    %125 = vmatprep.subr.mxu0 0.0
    %126 = vmatpush1.msra.mxu0 0.0
    %127 = vmatprep.subr.mxu0 0.0
    %128 = vmatpush1.msra.mxu0 0.0
    %129 = vmatprep.subr.mxu0 0.0
    %130 = vmatpush1.msra.mxu0 0.0
    %131 = vmatprep.subr.mxu0 0.0
    %132 = vmatpush1.msra.mxu0 0.0
    %133 = vmatprep.subr.mxu0 0.0
    %134 = vmatpush1.msra.mxu0 0.0
    %135 = vmatprep.subr.mxu0 0.0
    %136 = vmatpush1.msra.mxu0 0.0
    %137 = vmatprep.subr.mxu0 0.0
    %138 = vmatpush1.msra.mxu0 0.0
    %139 = vmatprep.subr.mxu0 0.0
    %140 = vmatpush1.msra.mxu0 0.0
    %141 = vmatprep.subr.mxu0 0.0
    %142 = vmatpush1.msra.mxu0 0.0
    %143 = vmatprep.subr.mxu0 0.0
    %144 = vmatpush1.msra.mxu0 0.0
    %145 = vmatprep.mubr.f32.mxu0 0.0
    %146 = vmatmul.mubr.f32.gmra.mrb[0].mxu0 %v79
    %v147 = vpop.f32.mrb[0].mxu0
    %v148 = vadd.f32 %v77, %v147
    %v149 = vpop.f32.mrb[0].mxu0
    %150 = vdwg.mxu0
    %151 = vst.msk [vmem:[#allocation7] sm:$0xff] %vm44, %v148
    // Predicated region
    $region22: #{tpu_custom_call.1} parent=1 // pred_check
      _
    $region23: #{tpu_custom_call.1} parent=1 // pred_check_branch
      %153 = sbr.rel (0) target = $region25
    $region24: #{tpu_custom_call.1} parent=1 // pred_region
      %s155 = ssub.s32 128, 128
      %156 = vsyncadd [#allocation4], %s155
      %s158 = sshll.u32 [#allocation7], 4
      %s159 = int_to_ptr.vmem [resolvable:$true] %s158
      %161 = dma.vmem_to_hbm [thread:$0]  %s159, 128, %s3, [#allocation4]
    $region25: #{tpu_custom_call.1} parent=1 // pred_fallthru
      _
    // Predicated region
    $region26: #{tpu_custom_call.1} parent=1 // pred_check
      _
    $region27: #{tpu_custom_call.1} parent=1 // pred_check_branch
      %163 = sbr.rel (0) target = $region29
    $region28: #{tpu_custom_call.1} parent=1 // pred_region
      %164 = dma.done [#allocation4], 128
    $region29: #{tpu_custom_call.1} parent=1 // pred_fallthru
      _
    %165 = vsyncpa [#allocation3], 1
    %166 = vsyncpa [#allocation6], 1
    %167 = vsyncpa [#allocation4], 1

</llo_original>
